<compile_context>
chip_gen: v6e
topology: v6e:2x2x1
jax: 0.10.0
libtpu: 0.0.40
codegen_flags: <defaults>
</compile_context>

<pallas_src>
import functools

import jax
import jax.numpy as jnp
from jax import lax
from jax.experimental import pallas as pl
from jax.experimental.pallas import tpu as pltpu


# ---------------------------------------------------------------------------
# Bulk matmul + bias kernel (phases 1 and 3: x @ w_x + b  and  h_seq @ w_out + b_out)
# ---------------------------------------------------------------------------
def _matmul_bias_kernel(x_ref, w_ref, b_ref, o_ref):
    acc = jnp.dot(x_ref[...], w_ref[...], preferred_element_type=jnp.float32)
    o_ref[...] = (acc + b_ref[...]).astype(o_ref.dtype)


def matmul_bias(x2d, w, b, *, out_dtype):
    """[M, K] @ [K, N] + [1, N]; one M-tile per grid step, weights VMEM-resident."""
    M, K = x2d.shape
    N = w.shape[1]
    tm = next((t for t in (512, 256, 128) if M % t == 0), M)
    const = lambda i: (0, 0)
    return pl.pallas_call(
        _matmul_bias_kernel,
        out_shape=jax.ShapeDtypeStruct((M, N), out_dtype),
        grid_spec=pltpu.PrefetchScalarGridSpec(
            num_scalar_prefetch=0,
            grid=(M // tm,),
            in_specs=[
                pl.BlockSpec((tm, K), lambda i: (i, 0)),
                pl.BlockSpec((K, N), const),   # resident weights
                pl.BlockSpec((1, N), const),   # resident bias
            ],
            out_specs=pl.BlockSpec((tm, N), lambda i: (i, 0)),
        ),
        compiler_params=pltpu.CompilerParams(
            dimension_semantics=("parallel",)),
    )(x2d, w, b)


# ---------------------------------------------------------------------------
# Recurrent kernel: only h @ w_h stays on the serial chain.
# ---------------------------------------------------------------------------
def _lstm_recurrent_kernel(zx_ref, wh_ref, h0_ref, c0_ref,
                           hseq_ref, hf_ref, cf_ref,
                           h_sc, c_sc, hb_sc, *, t_chunk, hidden):
    tc = pl.program_id(1)
    H = hidden

    @pl.when(tc == 0)
    def _init():
        h0 = h0_ref[...].astype(jnp.float32)
        h_sc[...] = h0
        c_sc[...] = c0_ref[...].astype(jnp.float32)
        hb_sc[...] = h0.astype(jnp.bfloat16)

    def step(s, carry):
        # z = Zx[t] + h_prev @ w_h  (Zx already contains x @ w_x + bias).
        z = zx_ref[s] + jnp.dot(hb_sc[...], wh_ref[...],
                                preferred_element_type=jnp.float32)
        # Gate order matches the module: f, c_hat, i, o (128-lane aligned slices).
        f_t = jax.nn.sigmoid(z[:, 0 * H:1 * H])
        C_t = jnp.tanh(z[:, 1 * H:2 * H])
        i_t = jax.nn.sigmoid(z[:, 2 * H:3 * H])
        o_t = jax.nn.sigmoid(z[:, 3 * H:4 * H])
        c_new = f_t * c_sc[...] + i_t * C_t
        h_new = o_t * jnp.tanh(c_new)
        c_sc[...] = c_new
        h_sc[...] = h_new
        hb = h_new.astype(jnp.bfloat16)
        hb_sc[...] = hb          # bf16 copy feeding next step's MXU dot
        hseq_ref[s] = hb         # per-step output (fc_out applied later in bulk)
        return carry

    lax.fori_loop(0, t_chunk, step, 0, unroll=True)

    # Output state blocks are VMEM-resident over the chunk axis (constant
    # index_map); writing them every chunk keeps them always-initialized.
    hf_ref[...] = h_sc[...]
    cf_ref[...] = c_sc[...]


def lstm_forward(x, h0, c0, w_x, w_h, b, w_out, b_out,
                 *, batch_tile=None, time_chunk=None):
    """x: [T, B, I] bf16; h0/c0: [B, H] f32 (or None -> zeros);
    w_x: [I, 4H] bf16; w_h: [H, 4H] bf16; b: [1, 4H] f32;
    w_out: [H, I] bf16; b_out: [1, I] f32.
    Returns (outputs [T, B, I] bf16, h_final [B, H] f32, c_final [B, H] f32)."""
    T, B, I = x.shape
    H = w_h.shape[0]
    if h0 is None:
        h0 = jnp.zeros((B, H), jnp.float32)
    if c0 is None:
        c0 = jnp.zeros((B, H), jnp.float32)

    # ---- Phase 1: bulk input projection (off the recurrent critical path) ----
    zx = matmul_bias(x.reshape(T * B, I), w_x, b, out_dtype=jnp.float32)
    zx = zx.reshape(T, B, 4 * H)

    # ---- Phase 2: recurrence ----
    bt = batch_tile if batch_tile is not None else min(B, 256)
    assert B % bt == 0
    nb = B // bt   # on v7x prefer bt such that nb >= 2 (two TensorCores)
    tcsz = time_chunk if time_chunk is not None else next(
        t for t in (16, 8, 4, 2, 1) if T % t == 0)
    ntc = T // tcsz

    kernel = functools.partial(_lstm_recurrent_kernel, t_chunk=tcsz, hidden=H)
    const2 = lambda bi, tc: (0, 0)
    state_map = lambda bi, tc: (bi, 0)
    seq_map = lambda bi, tc: (tc, bi, 0)

    h_seq, h_n, c_n = pl.pallas_call(
        kernel,
        out_shape=(
            jax.ShapeDtypeStruct((T, B, H), jnp.bfloat16),
            jax.ShapeDtypeStruct((B, H), jnp.float32),
            jax.ShapeDtypeStruct((B, H), jnp.float32),
        ),
        grid_spec=pltpu.PrefetchScalarGridSpec(
            num_scalar_prefetch=0,
            grid=(nb, ntc),
            in_specs=[
                pl.BlockSpec((tcsz, bt, 4 * H), seq_map),   # Zx streamed per chunk
                pl.BlockSpec((H, 4 * H), const2),           # w_h resident
                pl.BlockSpec((bt, H), state_map),           # h0
                pl.BlockSpec((bt, H), state_map),           # c0
            ],
            out_specs=[
                pl.BlockSpec((tcsz, bt, H), seq_map),       # h_t per step (bf16)
                pl.BlockSpec((bt, H), state_map),           # h_final
                pl.BlockSpec((bt, H), state_map),           # c_final
            ],
            scratch_shapes=[
                pltpu.VMEM((bt, H), jnp.float32),    # h carry (f32)
                pltpu.VMEM((bt, H), jnp.float32),    # c carry (f32)
                pltpu.VMEM((bt, H), jnp.bfloat16),   # bf16 h feeding the MXU
            ],
        ),
        compiler_params=pltpu.CompilerParams(
            dimension_semantics=("parallel", "arbitrary")),
    )(zx, w_h, h0, c0)

    # ---- Phase 3: bulk output projection (fc_out) ----
    out = matmul_bias(h_seq.reshape(T * B, H), w_out, b_out,
                      out_dtype=jnp.bfloat16)
    return out.reshape(T, B, I), h_n, c_n


def init_params(key, input_size, hidden_size, dtype=jnp.bfloat16):
    """Synthetic params matching nn.Linear(I+H, H) x4 + nn.Linear(H, I).

    PyTorch Linear computes y = x @ W.T + b; we generate W.T directly.
    The four gate weights are stacked along the output dim in order
    (f, c_hat, i, o) and split row-wise into the x-part [I,4H] and h-part [H,4H]."""
    D = input_size + hidden_size
    bound = 1.0 / (D ** 0.5)
    keys = jax.random.split(key, 10)
    ws = [jax.random.uniform(keys[i], (D, hidden_size), jnp.float32,
                             minval=-bound, maxval=bound) for i in range(4)]
    bs = [jax.random.uniform(keys[4 + i], (hidden_size,), jnp.float32,
                             minval=-bound, maxval=bound) for i in range(4)]
    w = jnp.concatenate(ws, axis=1)                       # [D, 4H]
    w_x = w[:input_size].astype(dtype)                    # [I, 4H]
    w_h = w[input_size:].astype(dtype)                    # [H, 4H]
    b = jnp.concatenate(bs)[None, :]                      # [1, 4H] f32

    bound_o = 1.0 / (hidden_size ** 0.5)
    w_out = jax.random.uniform(keys[8], (hidden_size, input_size), jnp.float32,
                               minval=-bound_o, maxval=bound_o).astype(dtype)
    b_out = jax.random.uniform(keys[9], (input_size,), jnp.float32,
                               minval=-bound_o, maxval=bound_o)[None, :]
    return w_x, w_h, b, w_out, b_out


def lstm_ref(x, h0, c0, w_x, w_h, b, w_out, b_out):
    """Pure-JAX reference mirroring the PyTorch LSTM.forward and the kernel's
    precision scheme (bf16 matmul inputs, f32 accumulation, bf16 recurrent cast).
    NOTE: vs a pure-f32 PyTorch LSTM this accumulates bf16 quantization drift
    over long sequences; pass f32 weights for an f32-exact path."""
    T, B, I = x.shape
    H = h0.shape[1]
    zx = (jnp.dot(x.reshape(T * B, I), w_x, preferred_element_type=jnp.float32)
          .reshape(T, B, 4 * H) + b)
    h = h0.astype(jnp.float32)
    c = c0.astype(jnp.float32)
    hs = []
    for t in range(T):
        z = zx[t] + jnp.dot(h.astype(jnp.bfloat16), w_h,
                            preferred_element_type=jnp.float32)
        f_t = jax.nn.sigmoid(z[:, 0 * H:1 * H])
        C_t = jnp.tanh(z[:, 1 * H:2 * H])
        i_t = jax.nn.sigmoid(z[:, 2 * H:3 * H])
        o_t = jax.nn.sigmoid(z[:, 3 * H:4 * H])
        c = f_t * c + i_t * C_t
        h = o_t * jnp.tanh(c)
        hs.append(h.astype(jnp.bfloat16))
    h_seq = jnp.stack(hs)
    out = (jnp.dot(h_seq.reshape(T * B, H), w_out,
                   preferred_element_type=jnp.float32) + b_out).reshape(T, B, I)
    return out, h, c


if __name__ == "__main__":
    # Small but lane-dense shapes: seq=8, batch=8, input=hidden=128.
    T, B, I, H = 8, 8, 128, 128
    key = jax.random.PRNGKey(0)
    k_x, k_h, k_c, k_p = jax.random.split(key, 4)

    x = jax.random.normal(k_x, (T, B, I), jnp.float32).astype(jnp.bfloat16)
    h0 = jax.random.normal(k_h, (B, H), jnp.float32)
    c0 = jax.random.normal(k_c, (B, H), jnp.float32)
    w_x, w_h, b, w_out, b_out = init_params(k_p, I, H, dtype=jnp.bfloat16)

    out, h_n, c_n = lstm_forward(x, h0, c0, w_x, w_h, b, w_out, b_out)
    jax.block_until_ready((out, h_n, c_n))

    out_r, h_r, c_r = lstm_ref(x, h0, c0, w_x, w_h, b, w_out, b_out)
    assert out.shape == (T, B, I) and h_n.shape == (B, H) and c_n.shape == (B, H)
    out_f32 = out.astype(jnp.float32)
    assert jnp.allclose(out_f32, out_r, atol=2e-2, rtol=2e-2), \
        float(jnp.max(jnp.abs(out_f32 - out_r)))
    assert jnp.allclose(h_n, h_r, atol=2e-3, rtol=2e-3), \
        float(jnp.max(jnp.abs(h_n - h_r)))
    assert jnp.allclose(c_n, c_r, atol=2e-3, rtol=2e-3), \
        float(jnp.max(jnp.abs(c_n - c_r)))

    print("KERNEL_OK")
</pallas_src>

<mosaic_0001>
module attributes {stable_mosaic.version = 11 : i64} {
  func.func @_matmul_bias_kernel(%arg0: i32, %arg1: memref<64x128xbf16, #tpu.memory_space<vmem>>, %arg2: memref<128x512xbf16, #tpu.memory_space<vmem>>, %arg3: memref<1x512xf32, #tpu.memory_space<vmem>>, %arg4: memref<64x512xf32, #tpu.memory_space<vmem>>) attributes {dimension_semantics = [#tpu.dimension_semantics<parallel>], iteration_bounds = array<i64: 1>, scalar_prefetch = 0 : i64, scratch_operands = 0 : i64, tpu.core_type = #tpu.core_type<tc>, window_params = [{transform_indices = @transform_0, window_bounds = array<i64: 64, 128>}, {pipeline_mode = #tpu.pipeline_mode<synchronous>, transform_indices = @transform_1, window_bounds = array<i64: 128, 512>}, {pipeline_mode = #tpu.pipeline_mode<synchronous>, transform_indices = @transform_2, window_bounds = array<i64: 1, 512>}, {transform_indices = @transform_3, window_bounds = array<i64: 64, 512>}]} {
    %c0 = arith.constant 0 : index
    %c0_0 = arith.constant 0 : index
    %0 = vector.load %arg1[%c0, %c0_0] : memref<64x128xbf16, #tpu.memory_space<vmem>>, vector<64x128xbf16>
    %c0_1 = arith.constant 0 : index
    %c0_2 = arith.constant 0 : index
    %1 = vector.load %arg2[%c0_1, %c0_2] : memref<128x512xbf16, #tpu.memory_space<vmem>>, vector<128x512xbf16>
    %cst = arith.constant dense<0.000000e+00> : vector<64x512xf32>
    %2 = tpu.matmul %0, %1, %cst {dimension_numbers = #tpu.dot_dimension_numbers<[1], [0], [0], [1], [0, 0, 1, 1], [], []>} : vector<64x128xbf16>, vector<128x512xbf16>, vector<64x512xf32> -> vector<64x512xf32>
    %c0_3 = arith.constant 0 : index
    %c0_4 = arith.constant 0 : index
    %3 = vector.load %arg3[%c0_3, %c0_4] : memref<1x512xf32, #tpu.memory_space<vmem>>, vector<1x512xf32>
    %4 = vector.broadcast %3 : vector<1x512xf32> to vector<64x512xf32>
    %5 = arith.addf %2, %4 : vector<64x512xf32>
    %c0_5 = arith.constant 0 : index
    %c0_6 = arith.constant 0 : index
    %6 = vector.load %arg4[%c0_5, %c0_6] : memref<64x512xf32, #tpu.memory_space<vmem>>, vector<64x512xf32>
    tpu.vector_store %arg4[%c0_5, %c0_6], %5 {strides = array<i32>} : memref<64x512xf32, #tpu.memory_space<vmem>>, vector<64x512xf32>,
    return
  }
  func.func @transform_0(%arg0: i32) -> (i32, i32) {
    %c0_i32 = arith.constant 0 : i32
    %c0_i32_0 = arith.constant 0 : i32
    return %arg0, %c0_i32 : i32, i32
  }
  func.func @transform_1(%arg0: i32) -> (i32, i32) {
    %c0_i32 = arith.constant 0 : i32
    %c0_i32_0 = arith.constant 0 : i32
    %c0_i32_1 = arith.constant 0 : i32
    return %c0_i32, %c0_i32_0 : i32, i32
  }
  func.func @transform_2(%arg0: i32) -> (i32, i32) {
    %c0_i32 = arith.constant 0 : i32
    %c0_i32_0 = arith.constant 0 : i32
    %c0_i32_1 = arith.constant 0 : i32
    return %c0_i32, %c0_i32_0 : i32, i32
  }
  func.func @transform_3(%arg0: i32) -> (i32, i32) {
    %c0_i32 = arith.constant 0 : i32
    %c0_i32_0 = arith.constant 0 : i32
    return %arg0, %c0_i32 : i32, i32
  }
}

</mosaic_0001>

<llo_original>
// kernel: tpu_custom_call.1
$region0: #{tpu_custom_call.1}
  #allocation0 [shape = 'u32[]', space=smem, size = 0x4, offset = 0x4, fixed_abs, tag = 'smem constant byte address 0x4 - core index']
  #allocation1 [shape = 'u32[144,128]{1,0:T(1,128)}', space=vmem, size = 0x12000, scoped, tag = 'internal scratch']
  %s0 = inlined_call_operand.hbm [shape: bf16[64,128], index: 0, kind: input, shape index: {}]
  %s1 = inlined_call_operand.hbm [shape: bf16[128,512], index: 1, kind: input, shape index: {}]
  %s2 = inlined_call_operand.hbm [shape: f32[1,512], index: 2, kind: input, shape index: {}]
  %s3 = inlined_call_operand.hbm [shape: f32[64,512], index: 3, kind: output, shape index: {}]
  %s4 = sld [smem:[#allocation0]]
  $region34: #{tpu_custom_call.1} parent=0
    _
  %s6 = ssub.s32 1, %s4
  %s7 = scalar_select 0, %s6, %s4
  $region1: #{tpu_custom_call.1} parent=0
    #allocation2 [shape = 'u8[16384]{0}', space=vmem, size = 0x4000, scoped, tag = 'input window, operand 0, single buffered']
    #allocation3 [shape = 's32[1]{0}', space=sflag, size = 0x4, scoped, tag = 'scoped memory for tpu_custom_call.1']
    #allocation4 [shape = 's32[1]{0}', space=sflag, size = 0x4, scoped, tag = 'scoped memory for tpu_custom_call.1']
    #allocation5 [shape = 'u8[131072]{0}', space=vmem, size = 0x20000, scoped, tag = 'input window, operand 1, single buffered']
    #allocation6 [shape = 's32[1]{0}', space=sflag, size = 0x4, scoped, tag = 'scoped memory for tpu_custom_call.1']
    #allocation7 [shape = 'u8[2048]{0}', space=vmem, size = 0x800, scoped, tag = 'input window, operand 2, single buffered']
    #allocation8 [shape = 'u8[131072]{0}', space=vmem, size = 0x20000, scoped, tag = 'output window, operand 0, single buffered']
    %8 = vsyncpa [#allocation3], 0
    %9 = vsyncpa [#allocation6], 0
    %10 = vsyncpa [#allocation4], 0
    // Predicated region
    $region2: #{tpu_custom_call.1} parent=1 // pred_check
      _
    $region3: #{tpu_custom_call.1} parent=1 // pred_check_branch
      %12 = sbr.rel (0) target = $region5
    $region4: #{tpu_custom_call.1} parent=1 // pred_region
      %s14 = ssub.s32 512, 512
      %15 = vsyncadd [#allocation3], %s14
      %s16 = sshll.u32 [#allocation2], 4
      %s17 = int_to_ptr.vmem [resolvable:$true] %s16
      %22 = dma.hbm_to_vmem [thread:$0]  %s0, 512, %s17, [#allocation3], 64, 64, 4
    $region5: #{tpu_custom_call.1} parent=1 // pred_fallthru
      _
    // Predicated region
    $region6: #{tpu_custom_call.1} parent=1 // pred_check
      _
    $region7: #{tpu_custom_call.1} parent=1 // pred_check_branch
      %24 = sbr.rel (0) target = $region9
    $region8: #{tpu_custom_call.1} parent=1 // pred_region
      %s26 = ssub.s32 4096, 4096
      %27 = vsyncadd [#allocation6], %s26
      %s28 = sshll.u32 [#allocation5], 4
      %s29 = int_to_ptr.vmem [resolvable:$true] %s28
      %34 = dma.hbm_to_vmem [thread:$0]  %s1, 4096, %s29, [#allocation6], 256, 256, 16
    $region9: #{tpu_custom_call.1} parent=1 // pred_fallthru
      _
    // Predicated region
    $region10: #{tpu_custom_call.1} parent=1 // pred_check
      _
    $region11: #{tpu_custom_call.1} parent=1 // pred_check_branch
      %36 = sbr.rel (0) target = $region13
    $region12: #{tpu_custom_call.1} parent=1 // pred_region
      %s38 = ssub.s32 64, 64
      %39 = vsyncadd [#allocation6], %s38
      %s41 = sshll.u32 [#allocation7], 4
      %s42 = int_to_ptr.vmem [resolvable:$true] %s41
      %44 = dma.hbm_to_vmem [thread:$0]  %s2, 64, %s42, [#allocation6]
    $region13: #{tpu_custom_call.1} parent=1 // pred_fallthru
      _
    // Predicated region
    $region14: #{tpu_custom_call.1} parent=1 // pred_check
      _
    $region15: #{tpu_custom_call.1} parent=1 // pred_check_branch
      %46 = sbr.rel (0) target = $region17
    $region16: #{tpu_custom_call.1} parent=1 // pred_region
      %47 = dma.done [#allocation3], 512
    $region17: #{tpu_custom_call.1} parent=1 // pred_fallthru
      _
    // Predicated region
    $region18: #{tpu_custom_call.1} parent=1 // pred_check
      _
    $region19: #{tpu_custom_call.1} parent=1 // pred_check_branch
      %49 = sbr.rel (0) target = $region21
    $region20: #{tpu_custom_call.1} parent=1 // pred_region
      %50 = dma.done [#allocation6], 4096
    $region21: #{tpu_custom_call.1} parent=1 // pred_fallthru
      _
    // Predicated region
    $region22: #{tpu_custom_call.1} parent=1 // pred_check
      _
    $region23: #{tpu_custom_call.1} parent=1 // pred_check_branch
      %52 = sbr.rel (0) target = $region25
    $region24: #{tpu_custom_call.1} parent=1 // pred_region
      %53 = dma.done [#allocation6], 64
    $region25: #{tpu_custom_call.1} parent=1 // pred_fallthru
      _
    %v55 = vld [vmem:[#allocation2] sm:$0xf]
    %v56 = vld [vmem:[#allocation2 + $0x4] sm:$0xf]
    %v57 = vld [vmem:[#allocation2 + $0x8] sm:$0xf]
    %v58 = vld [vmem:[#allocation2 + $0xc] sm:$0xf]
    %v59 = vld [vmem:[#allocation2 + $0x10] sm:$0xf]
    %v60 = vld [vmem:[#allocation2 + $0x14] sm:$0xf]
    %v61 = vld [vmem:[#allocation2 + $0x18] sm:$0xf]
    %v62 = vld [vmem:[#allocation2 + $0x1c] sm:$0xf]
    %v63 = vld [vmem:[#allocation5] sm:$0xff]
    %v64 = vld [vmem:[#allocation5 + $0x8] sm:$0xff]
    %v65 = vld [vmem:[#allocation5 + $0x10] sm:$0xff]
    %v66 = vld [vmem:[#allocation5 + $0x18] sm:$0xff]
    %v67 = vld [vmem:[#allocation5 + $0x20] sm:$0xff]
    %v68 = vld [vmem:[#allocation5 + $0x28] sm:$0xff]
    %v69 = vld [vmem:[#allocation5 + $0x30] sm:$0xff]
    %v70 = vld [vmem:[#allocation5 + $0x38] sm:$0xff]
    %v71 = vld [vmem:[#allocation5 + $0x40] sm:$0xff]
    %v72 = vld [vmem:[#allocation5 + $0x48] sm:$0xff]
    %v73 = vld [vmem:[#allocation5 + $0x50] sm:$0xff]
    %v74 = vld [vmem:[#allocation5 + $0x58] sm:$0xff]
    %v75 = vld [vmem:[#allocation5 + $0x60] sm:$0xff]
    %v76 = vld [vmem:[#allocation5 + $0x68] sm:$0xff]
    %v77 = vld [vmem:[#allocation5 + $0x70] sm:$0xff]
    %v78 = vld [vmem:[#allocation5 + $0x78] sm:$0xff]
    %v79 = vld [vmem:[#allocation5 + $0x80] sm:$0xff]
    %v80 = vld [vmem:[#allocation5 + $0x88] sm:$0xff]
    %v81 = vld [vmem:[#allocation5 + $0x90] sm:$0xff]
    %v82 = vld [vmem:[#allocation5 + $0x98] sm:$0xff]
    %v83 = vld [vmem:[#allocation5 + $0xa0] sm:$0xff]
    %v84 = vld [vmem:[#allocation5 + $0xa8] sm:$0xff]
    %v85 = vld [vmem:[#allocation5 + $0xb0] sm:$0xff]
    %v86 = vld [vmem:[#allocation5 + $0xb8] sm:$0xff]
    %v87 = vld [vmem:[#allocation5 + $0xc0] sm:$0xff]
    %v88 = vld [vmem:[#allocation5 + $0xc8] sm:$0xff]
    %v89 = vld [vmem:[#allocation5 + $0xd0] sm:$0xff]
    %v90 = vld [vmem:[#allocation5 + $0xd8] sm:$0xff]
    %v91 = vld [vmem:[#allocation5 + $0xe0] sm:$0xff]
    %v92 = vld [vmem:[#allocation5 + $0xe8] sm:$0xff]
    %v93 = vld [vmem:[#allocation5 + $0xf0] sm:$0xff]
    %v94 = vld [vmem:[#allocation5 + $0xf8] sm:$0xff]
    %v95 = vld [vmem:[#allocation7] sm:$0xf]
    %v97 = vlaneseq
    %v98 = vshrl.u32 %v97, 7
    %v99 = vsub.s32 0, %v98
    %v100 = vrot.slane %v95, %v99
    %v101 = vlaneseq
    %v102 = vshrl.u32 %v101, 7
    %v103 = vsub.s32 1, %v102
    %v104 = vrot.slane %v95, %v103
    %v105 = vlaneseq
    %v106 = vshrl.u32 %v105, 7
    %v107 = vsub.s32 2, %v106
    %v108 = vrot.slane %v95, %v107
    %v109 = vlaneseq
    %v110 = vshrl.u32 %v109, 7
    %v111 = vsub.s32 3, %v110
    %v112 = vrot.slane %v95, %v111
    %v125 = vunpack.c.l.b16 %v55
    %v126 = vunpack.c.l.b16 %v56
    %v127 = vunpack.c.l.b16 %v57
    %v128 = vunpack.c.l.b16 %v58
    %v129 = vunpack.c.l.b16 %v59
    %v130 = vunpack.c.l.b16 %v60
    %v131 = vunpack.c.l.b16 %v61
    %v132 = vunpack.c.l.b16 %v62
    %v133 = vpack.c.b16 %v126, %v125
    %v134 = vpack.c.b16 %v128, %v127
    %v135 = vpack.c.b16 %v130, %v129
    %v136 = vpack.c.b16 %v132, %v131
    %v173 = vunpack.c.l.b16 %v63
    %v174 = vunpack.c.h.b16 %v63
    %v175 = vunpack.c.l.b16 %v64
    %v176 = vunpack.c.h.b16 %v64
    %v177 = vunpack.c.l.b16 %v65
    %v178 = vunpack.c.h.b16 %v65
    %v179 = vunpack.c.l.b16 %v66
    %v180 = vunpack.c.h.b16 %v66
    %v181 = vunpack.c.l.b16 %v67
    %v182 = vunpack.c.h.b16 %v67
    %v183 = vunpack.c.l.b16 %v68
    %v184 = vunpack.c.h.b16 %v68
    %v185 = vunpack.c.l.b16 %v69
    %v186 = vunpack.c.h.b16 %v69
    %v187 = vunpack.c.l.b16 %v70
    %v188 = vunpack.c.h.b16 %v70
    %v189 = vunpack.c.l.b16 %v71
    %v190 = vunpack.c.h.b16 %v71
    %v191 = vunpack.c.l.b16 %v72
    %v192 = vunpack.c.h.b16 %v72
    %v193 = vunpack.c.l.b16 %v73
    %v194 = vunpack.c.h.b16 %v73
    %v195 = vunpack.c.l.b16 %v74
    %v196 = vunpack.c.h.b16 %v74
    %v197 = vunpack.c.l.b16 %v75
    %v198 = vunpack.c.h.b16 %v75
    %v199 = vunpack.c.l.b16 %v76
    %v200 = vunpack.c.h.b16 %v76
    %v201 = vunpack.c.l.b16 %v77
    %v202 = vunpack.c.h.b16 %v77
    %v203 = vunpack.c.l.b16 %v78
    %v204 = vunpack.c.h.b16 %v78
    %v205 = vunpack.c.l.b16 %v79
    %v206 = vunpack.c.h.b16 %v79
    %v207 = vunpack.c.l.b16 %v80
    %v208 = vunpack.c.h.b16 %v80
    %v209 = vunpack.c.l.b16 %v81
    %v210 = vunpack.c.h.b16 %v81
    %v211 = vunpack.c.l.b16 %v82
    %v212 = vunpack.c.h.b16 %v82
    %v213 = vunpack.c.l.b16 %v83
    %v214 = vunpack.c.h.b16 %v83
    %v215 = vunpack.c.l.b16 %v84
    %v216 = vunpack.c.h.b16 %v84
    %v217 = vunpack.c.l.b16 %v85
    %v218 = vunpack.c.h.b16 %v85
    %v219 = vunpack.c.l.b16 %v86
    %v220 = vunpack.c.h.b16 %v86
    %v221 = vunpack.c.l.b16 %v87
    %v222 = vunpack.c.h.b16 %v87
    %v223 = vunpack.c.l.b16 %v88
    %v224 = vunpack.c.h.b16 %v88
    %v225 = vunpack.c.l.b16 %v89
    %v226 = vunpack.c.h.b16 %v89
    %v227 = vunpack.c.l.b16 %v90
    %v228 = vunpack.c.h.b16 %v90
    %v229 = vunpack.c.l.b16 %v91
    %v230 = vunpack.c.h.b16 %v91
    %v231 = vunpack.c.l.b16 %v92
    %v232 = vunpack.c.h.b16 %v92
    %v233 = vunpack.c.l.b16 %v93
    %v234 = vunpack.c.h.b16 %v93
    %v235 = vunpack.c.l.b16 %v94
    %v236 = vunpack.c.h.b16 %v94
    %v237 = vpack.c.b16 %v177, %v173
    %v238 = vpack.c.b16 %v178, %v174
    %v239 = vpack.c.b16 %v179, %v175
    %v240 = vpack.c.b16 %v180, %v176
    %v241 = vpack.c.b16 %v185, %v181
    %v242 = vpack.c.b16 %v186, %v182
    %v243 = vpack.c.b16 %v187, %v183
    %v244 = vpack.c.b16 %v188, %v184
    %v245 = vpack.c.b16 %v193, %v189
    %v246 = vpack.c.b16 %v194, %v190
    %v247 = vpack.c.b16 %v195, %v191
    %v248 = vpack.c.b16 %v196, %v192
    %v249 = vpack.c.b16 %v201, %v197
    %v250 = vpack.c.b16 %v202, %v198
    %v251 = vpack.c.b16 %v203, %v199
    %v252 = vpack.c.b16 %v204, %v200
    %v253 = vpack.c.b16 %v209, %v205
    %v254 = vpack.c.b16 %v210, %v206
    %v255 = vpack.c.b16 %v211, %v207
    %v256 = vpack.c.b16 %v212, %v208
    %v257 = vpack.c.b16 %v217, %v213
    %v258 = vpack.c.b16 %v218, %v214
    %v259 = vpack.c.b16 %v219, %v215
    %v260 = vpack.c.b16 %v220, %v216
    %v261 = vpack.c.b16 %v225, %v221
    %v262 = vpack.c.b16 %v226, %v222
    %v263 = vpack.c.b16 %v227, %v223
    %v264 = vpack.c.b16 %v228, %v224
    %v265 = vpack.c.b16 %v233, %v229
    %v266 = vpack.c.b16 %v234, %v230
    %v267 = vpack.c.b16 %v235, %v231
    %v268 = vpack.c.b16 %v236, %v232
    %301 = vmatprep.subr.bf16.mxu0 %v266
    %302 = vmatpush1.bf16.msra.mxu0 %v265
    %303 = vmatprep.subr.bf16.mxu0 %v262
    %304 = vmatpush1.bf16.msra.mxu0 %v261
    %305 = vmatprep.subr.bf16.mxu0 %v258
    %306 = vmatpush1.bf16.msra.mxu0 %v257
    %307 = vmatprep.subr.bf16.mxu0 %v254
    %308 = vmatpush1.bf16.msra.mxu0 %v253
    %309 = vmatprep.subr.bf16.mxu0 %v250
    %310 = vmatpush1.bf16.msra.mxu0 %v249
    %311 = vmatprep.subr.bf16.mxu0 %v246
    %312 = vmatpush1.bf16.msra.mxu0 %v245
    %313 = vmatprep.subr.bf16.mxu0 %v242
    %314 = vmatpush1.bf16.msra.mxu0 %v241
    %315 = vmatprep.subr.bf16.mxu0 %v238
    %316 = vmatpush1.bf16.msra.mxu0 %v237
    %317 = vmatprep.subr.bf16.mxu0 0
    %318 = vmatpush2.bf16.msra.mxu0 0
    %319 = vmatprep.subr.bf16.mxu0 0
    %320 = vmatpush2.bf16.msra.mxu0 0
    %321 = vmatprep.subr.bf16.mxu0 0
    %322 = vmatpush2.bf16.msra.mxu0 0
    %323 = vmatprep.subr.bf16.mxu0 0
    %324 = vmatpush2.bf16.msra.mxu0 0
    %325 = vmatprep.subr.bf16.mxu0 0
    %326 = vmatpush2.bf16.msra.mxu0 0
    %327 = vmatprep.subr.bf16.mxu0 0
    %328 = vmatpush2.bf16.msra.mxu0 0
    %329 = vmatprep.subr.bf16.mxu0 0
    %330 = vmatpush2.bf16.msra.mxu0 0
    %331 = vmatprep.subr.bf16.mxu0 0
    %332 = vmatpush2.bf16.msra.mxu0 0
    %333 = vmatprep.mubr.bf16.mxu0 0
    %334 = vmatmul.mubr.bf16.gmra.mxu0 %v133
    %v335 = vpop.f32.mrf.mxu0
    %v336 = vadd.f32 %v100, %v335
    %v337 = vpop.f32.mrf.mxu0
    %v338 = vadd.f32 %v104, %v337
    %v339 = vpop.f32.mrf.mxu0
    %v340 = vadd.f32 %v100, %v339
    %v341 = vpop.f32.mrf.mxu0
    %v342 = vadd.f32 %v104, %v341
    %343 = vmatprep.mubr.bf16.mxu0 0
    %344 = vmatmul.mubr.bf16.gmra.mxu0 %v134
    %v345 = vpop.f32.mrf.mxu0
    %v346 = vadd.f32 %v100, %v345
    %v347 = vpop.f32.mrf.mxu0
    %v348 = vadd.f32 %v104, %v347
    %v349 = vpop.f32.mrf.mxu0
    %v350 = vadd.f32 %v100, %v349
    %v351 = vpop.f32.mrf.mxu0
    %v352 = vadd.f32 %v104, %v351
    %353 = vmatprep.mubr.bf16.mxu0 0
    %354 = vmatmul.mubr.bf16.gmra.mxu0 %v135
    %v355 = vpop.f32.mrf.mxu0
    %v356 = vadd.f32 %v100, %v355
    %v357 = vpop.f32.mrf.mxu0
    %v358 = vadd.f32 %v104, %v357
    %v359 = vpop.f32.mrf.mxu0
    %v360 = vadd.f32 %v100, %v359
    %v361 = vpop.f32.mrf.mxu0
    %v362 = vadd.f32 %v104, %v361
    %363 = vmatprep.mubr.bf16.mxu0 0
    %364 = vmatmul.mubr.bf16.gmra.mxu0 %v136
    %v365 = vpop.f32.mrf.mxu0
    %v366 = vadd.f32 %v100, %v365
    %v367 = vpop.f32.mrf.mxu0
    %v368 = vadd.f32 %v104, %v367
    %v369 = vpop.f32.mrf.mxu0
    %v370 = vadd.f32 %v100, %v369
    %v371 = vpop.f32.mrf.mxu0
    %v372 = vadd.f32 %v104, %v371
    %373 = vdwg.mxu0
    %374 = vmatprep.subr.bf16.mxu0 %v268
    %375 = vmatpush1.bf16.msra.mxu0 %v267
    %376 = vmatprep.subr.bf16.mxu0 %v264
    %377 = vmatpush1.bf16.msra.mxu0 %v263
    %378 = vmatprep.subr.bf16.mxu0 %v260
    %379 = vmatpush1.bf16.msra.mxu0 %v259
    %380 = vmatprep.subr.bf16.mxu0 %v256
    %381 = vmatpush1.bf16.msra.mxu0 %v255
    %382 = vmatprep.subr.bf16.mxu0 %v252
    %383 = vmatpush1.bf16.msra.mxu0 %v251
    %384 = vmatprep.subr.bf16.mxu0 %v248
    %385 = vmatpush1.bf16.msra.mxu0 %v247
    %386 = vmatprep.subr.bf16.mxu0 %v244
    %387 = vmatpush1.bf16.msra.mxu0 %v243
    %388 = vmatprep.subr.bf16.mxu0 %v240
    %389 = vmatpush1.bf16.msra.mxu0 %v239
    %390 = vmatprep.subr.bf16.mxu0 0
    %391 = vmatpush2.bf16.msra.mxu0 0
    %392 = vmatprep.subr.bf16.mxu0 0
    %393 = vmatpush2.bf16.msra.mxu0 0
    %394 = vmatprep.subr.bf16.mxu0 0
    %395 = vmatpush2.bf16.msra.mxu0 0
    %396 = vmatprep.subr.bf16.mxu0 0
    %397 = vmatpush2.bf16.msra.mxu0 0
    %398 = vmatprep.subr.bf16.mxu0 0
    %399 = vmatpush2.bf16.msra.mxu0 0
    %400 = vmatprep.subr.bf16.mxu0 0
    %401 = vmatpush2.bf16.msra.mxu0 0
    %402 = vmatprep.subr.bf16.mxu0 0
    %403 = vmatpush2.bf16.msra.mxu0 0
    %404 = vmatprep.subr.bf16.mxu0 0
    %405 = vmatpush2.bf16.msra.mxu0 0
    %406 = vmatprep.mubr.bf16.mxu0 0
    %407 = vmatmul.mubr.bf16.gmra.mxu0 %v133
    %v408 = vpop.f32.mrf.mxu0
    %v409 = vadd.f32 %v108, %v408
    %v410 = vpop.f32.mrf.mxu0
    %v411 = vadd.f32 %v112, %v410
    %v412 = vpop.f32.mrf.mxu0
    %v413 = vadd.f32 %v108, %v412
    %v414 = vpop.f32.mrf.mxu0
    %v415 = vadd.f32 %v112, %v414
    %416 = vmatprep.mubr.bf16.mxu0 0
    %417 = vmatmul.mubr.bf16.gmra.mxu0 %v134
    %v418 = vpop.f32.mrf.mxu0
    %v419 = vadd.f32 %v108, %v418
    %v420 = vpop.f32.mrf.mxu0
    %v421 = vadd.f32 %v112, %v420
    %v422 = vpop.f32.mrf.mxu0
    %v423 = vadd.f32 %v108, %v422
    %v424 = vpop.f32.mrf.mxu0
    %v425 = vadd.f32 %v112, %v424
    %426 = vmatprep.mubr.bf16.mxu0 0
    %427 = vmatmul.mubr.bf16.gmra.mxu0 %v135
    %v428 = vpop.f32.mrf.mxu0
    %v429 = vadd.f32 %v108, %v428
    %v430 = vpop.f32.mrf.mxu0
    %v431 = vadd.f32 %v112, %v430
    %v432 = vpop.f32.mrf.mxu0
    %v433 = vadd.f32 %v108, %v432
    %v434 = vpop.f32.mrf.mxu0
    %v435 = vadd.f32 %v112, %v434
    %436 = vmatprep.mubr.bf16.mxu0 0
    %437 = vmatmul.mubr.bf16.gmra.mxu0 %v136
    %v438 = vpop.f32.mrf.mxu0
    %v439 = vadd.f32 %v108, %v438
    %v440 = vpop.f32.mrf.mxu0
    %v441 = vadd.f32 %v112, %v440
    %v442 = vpop.f32.mrf.mxu0
    %v443 = vadd.f32 %v108, %v442
    %v444 = vpop.f32.mrf.mxu0
    %v445 = vadd.f32 %v112, %v444
    %446 = vdwg.mxu0
    %447 = vst [vmem:[#allocation8] sm:$0xff] %v336
    %448 = vst [vmem:[#allocation8 + $0x8] sm:$0xff] %v338
    %449 = vst [vmem:[#allocation8 + $0x10] sm:$0xff] %v409
    %450 = vst [vmem:[#allocation8 + $0x18] sm:$0xff] %v411
    %451 = vst [vmem:[#allocation8 + $0x20] sm:$0xff] %v340
    %452 = vst [vmem:[#allocation8 + $0x28] sm:$0xff] %v342
    %453 = vst [vmem:[#allocation8 + $0x30] sm:$0xff] %v413
    %454 = vst [vmem:[#allocation8 + $0x38] sm:$0xff] %v415
    %455 = vst [vmem:[#allocation8 + $0x40] sm:$0xff] %v346
    %456 = vst [vmem:[#allocation8 + $0x48] sm:$0xff] %v348
    %457 = vst [vmem:[#allocation8 + $0x50] sm:$0xff] %v419
    %458 = vst [vmem:[#allocation8 + $0x58] sm:$0xff] %v421
    %459 = vst [vmem:[#allocation8 + $0x60] sm:$0xff] %v350
    %460 = vst [vmem:[#allocation8 + $0x68] sm:$0xff] %v352
    %461 = vst [vmem:[#allocation8 + $0x70] sm:$0xff] %v423
    %462 = vst [vmem:[#allocation8 + $0x78] sm:$0xff] %v425
    %463 = vst [vmem:[#allocation8 + $0x80] sm:$0xff] %v356
    %464 = vst [vmem:[#allocation8 + $0x88] sm:$0xff] %v358
    %465 = vst [vmem:[#allocation8 + $0x90] sm:$0xff] %v429
    %466 = vst [vmem:[#allocation8 + $0x98] sm:$0xff] %v431
    %467 = vst [vmem:[#allocation8 + $0xa0] sm:$0xff] %v360
    %468 = vst [vmem:[#allocation8 + $0xa8] sm:$0xff] %v362
    %469 = vst [vmem:[#allocation8 + $0xb0] sm:$0xff] %v433
    %470 = vst [vmem:[#allocation8 + $0xb8] sm:$0xff] %v435
    %471 = vst [vmem:[#allocation8 + $0xc0] sm:$0xff] %v366
    %472 = vst [vmem:[#allocation8 + $0xc8] sm:$0xff] %v368
    %473 = vst [vmem:[#allocation8 + $0xd0] sm:$0xff] %v439
    %474 = vst [vmem:[#allocation8 + $0xd8] sm:$0xff] %v441
    %475 = vst [vmem:[#allocation8 + $0xe0] sm:$0xff] %v370
    %476 = vst [vmem:[#allocation8 + $0xe8] sm:$0xff] %v372
    %477 = vst [vmem:[#allocation8 + $0xf0] sm:$0xff] %v443
    %478 = vst [vmem:[#allocation8 + $0xf8] sm:$0xff] %v445
    // Predicated region
    $region26: #{tpu_custom_call.1} parent=1 // pred_check
      _
    $region27: #{tpu_custom_call.1} parent=1 // pred_check_branch
      %480 = sbr.rel (0) target = $region29
    $region28: #{tpu_custom_call.1} parent=1 // pred_region
      %s482 = ssub.s32 4096, 4096
      %483 = vsyncadd [#allocation4], %s482
      %s484 = sshll.u32 [#allocation8], 4
      %s485 = int_to_ptr.vmem [resolvable:$true] %s484
      %490 = dma.vmem_to_hbm [thread:$0]  %s485, 4096, %s3, [#allocation4], 512, 512, 32
    $region29: #{tpu_custom_call.1} parent=1 // pred_fallthru
      _
    // Predicated region
    $region30: #{tpu_custom_call.1} parent=1 // pred_check
      _
    $region31: #{tpu_custom_call.1} parent=1 // pred_check_branch
      %492 = sbr.rel (0) target = $region33
    $region32: #{tpu_custom_call.1} parent=1 // pred_region
      %493 = dma.done [#allocation4], 4096
    $region33: #{tpu_custom_call.1} parent=1 // pred_fallthru
      _
    %494 = vsyncpa [#allocation3], 1
    %495 = vsyncpa [#allocation6], 1
    %496 = vsyncpa [#allocation4], 1

</llo_original>
